<compile_context>
chip_gen: v6e
topology: v6e:2x2x1
jax: 0.10.0
libtpu: 0.0.40
codegen_flags: <defaults>
</compile_context>

<pallas_src>
import functools

import jax
import jax.numpy as jnp
from jax.experimental import pallas as pl
from jax.experimental.pallas import tpu as pltpu


def _identity(x):
    return x


def _fc_kernel(x_ref, w_ref, b_ref, o_ref, *, activation):
    # x_ref: (bt, L)   w_ref: (L, O')   b_ref: (1, O')   o_ref: (bt, O')
    y = jnp.dot(x_ref[...], w_ref[...], preferred_element_type=jnp.float32)
    y = y + b_ref[...].astype(jnp.float32)
    o_ref[...] = activation(y).astype(o_ref.dtype)


def _pick_batch_tile(B, row_bytes, resident_bytes, max_bt,
                     budget_bytes=32 << 20):
    """Largest batch tile whose double-buffered blocks fit the VMEM budget."""
    candidates = [c for c in (256, 128, 64, 32, 16, 8) if c <= max_bt] or [8]
    bt = candidates[-1]
    for c in candidates:
        if 2 * (c * row_bytes + resident_bytes) <= budget_bytes:
            bt = c
            break
    return max(min(bt, B), 1)


def _compiler_params(num_grid_axes, block_bytes):
    # Double-buffered blocks + headroom; clamp to v7x physical VMEM.
    vmem_limit = int(min(max(2 * block_bytes + (4 << 20), 16 << 20), 64 << 20))
    return pltpu.CompilerParams(
        dimension_semantics=("parallel",) * num_grid_axes,
        vmem_limit_bytes=vmem_limit)


def _cost(B, n, out_size, in_size, itemsize):
    flops = 2 * B * n * out_size * in_size
    bytes_accessed = itemsize * (B * n * in_size + n * in_size * out_size
                                 + n * out_size + B * n * out_size)
    return pl.CostEstimate(flops=flops, transcendentals=0,
                           bytes_accessed=bytes_accessed)


@functools.partial(
    jax.jit, static_argnames=("activation", "block_b", "w_cat_max_bytes"))
def parallel_fc(inputs, weight, bias=None, *, activation=None, block_b=256,
                w_cat_max_bytes=8 << 20):
    """ParallelFC forward.  inputs: (B, n, L) or (B, L); returns (B, n, O)."""
    n, out_size, in_size = weight.shape
    act = activation if activation is not None else _identity
    if bias is None:
        bias = jnp.zeros((n, out_size), dtype=weight.dtype)
    itemsize = jnp.dtype(inputs.dtype).itemsize
    kernel = functools.partial(_fc_kernel, activation=act)

    if inputs.ndim == 2:
        assert inputs.shape[1] == in_size, inputs.shape
        B = inputs.shape[0]

        if weight.size * jnp.dtype(weight.dtype).itemsize <= w_cat_max_bytes:
            # --- fused path: one big lane-dense matmul over all n layers ---
            w_cat = jnp.transpose(weight, (2, 0, 1)).reshape(
                in_size, n * out_size)                      # (L, n*O)
            b_cat = jnp.reshape(bias, (1, n * out_size))    # (1, n*O)
            row_bytes = (in_size + n * out_size) * itemsize
            resident = (w_cat.size + b_cat.size) * itemsize
            bt = _pick_batch_tile(B, row_bytes, resident, block_b)
            block_bytes = bt * row_bytes + resident
            out = pl.pallas_call(
                kernel,
                out_shape=jax.ShapeDtypeStruct((B, n * out_size), inputs.dtype),
                grid=(pl.cdiv(B, bt),),
                in_specs=[
                    pl.BlockSpec((bt, in_size), lambda j: (j, 0)),
                    # constant index -> weights/bias stay resident in VMEM
                    pl.BlockSpec((in_size, n * out_size), lambda j: (0, 0)),
                    pl.BlockSpec((1, n * out_size), lambda j: (0, 0)),
                ],
                out_specs=pl.BlockSpec((bt, n * out_size), lambda j: (j, 0)),
                compiler_params=_compiler_params(1, block_bytes),
                cost_estimate=_cost(B, n, out_size, in_size, itemsize),
            )(inputs, w_cat, b_cat)
            return out.reshape(B, n, out_size)

        # --- large-weight fallback: stream one layer's weight per grid step.
        # x stays 2-D in HBM (never broadcast n-fold); its index_map ignores n.
        w_t = jnp.transpose(weight, (0, 2, 1))              # (n, L, O)
        b3 = bias[:, None, :]                               # (n, 1, O)
        row_bytes = (in_size + out_size) * itemsize
        resident = (in_size * out_size + out_size) * itemsize
        bt = _pick_batch_tile(B, row_bytes, resident, block_b)
        block_bytes = bt * row_bytes + resident
        out = pl.pallas_call(
            kernel,
            out_shape=jax.ShapeDtypeStruct((n, B, out_size), inputs.dtype),
            grid=(n, pl.cdiv(B, bt)),     # n outer: weight DMA'd once per layer
            in_specs=[
                pl.BlockSpec((bt, in_size), lambda i, j: (j, 0)),
                pl.BlockSpec((None, in_size, out_size), lambda i, j: (i, 0, 0)),
                pl.BlockSpec((None, 1, out_size), lambda i, j: (i, 0, 0)),
            ],
            out_specs=pl.BlockSpec((None, bt, out_size), lambda i, j: (i, j, 0)),
            compiler_params=_compiler_params(2, block_bytes),
            cost_estimate=_cost(B, n, out_size, in_size, itemsize),
        )(inputs, w_t, b3)
        return jnp.transpose(out, (1, 0, 2))                # (B, n, O)

    if inputs.ndim == 3:
        assert inputs.shape[1] == n and inputs.shape[2] == in_size, inputs.shape
        B = inputs.shape[0]
        # n-major views so each grid step is a clean squeezed 2D tile.
        x_t = jnp.transpose(inputs, (1, 0, 2))              # (n, B, L)
        w_t = jnp.transpose(weight, (0, 2, 1))              # (n, L, O) canonical
        b3 = bias[:, None, :]                               # (n, 1, O)
        row_bytes = (in_size + out_size) * itemsize
        resident = (in_size * out_size + out_size) * itemsize
        # TODO(synk): for very large per-layer weights (L*O*itemsize >> 16 MiB),
        # add a K/N grid axis to tile the weight instead of a full (L, O) block.
        bt = _pick_batch_tile(B, row_bytes, resident, block_b)
        block_bytes = bt * row_bytes + resident
        out = pl.pallas_call(
            kernel,
            out_shape=jax.ShapeDtypeStruct((n, B, out_size), inputs.dtype),
            grid=(n, pl.cdiv(B, bt)),     # n outer: weight re-DMA only per layer
            in_specs=[
                pl.BlockSpec((None, bt, in_size), lambda i, j: (i, j, 0)),
                pl.BlockSpec((None, in_size, out_size), lambda i, j: (i, 0, 0)),
                pl.BlockSpec((None, 1, out_size), lambda i, j: (i, 0, 0)),
            ],
            out_specs=pl.BlockSpec((None, bt, out_size), lambda i, j: (i, j, 0)),
            compiler_params=_compiler_params(2, block_bytes),
            cost_estimate=_cost(B, n, out_size, in_size, itemsize),
        )(x_t, w_t, b3)
        return jnp.transpose(out, (1, 0, 2))                # (B, n, O)

    raise ValueError("Wrong inputs.ndim=%d" % inputs.ndim)


if __name__ == "__main__":
    key = jax.random.PRNGKey(0)
    B, n, in_size, out_size = 16, 4, 32, 32
    k1, k2, k3, k4 = jax.random.split(key, 4)

    x3 = jax.random.normal(k1, (B, n, in_size), dtype=jnp.float32)
    x2 = jax.random.normal(k4, (B, in_size), dtype=jnp.float32)
    w = 0.1 * jax.random.normal(k2, (n, out_size, in_size), dtype=jnp.float32)
    b = 0.1 * jax.random.normal(k3, (n, out_size), dtype=jnp.float32)

    hi = jax.lax.Precision.HIGHEST
    ref3 = jnp.einsum("bnl,nol->bno", x3, w, precision=hi) + b[None]
    ref2 = jnp.einsum("bl,nol->bno", x2, w, precision=hi) + b[None]

    # 3-D input path: (B, n, L) -> (B, n, O)
    y3 = jax.block_until_ready(parallel_fc(x3, w, b))
    assert y3.shape == (B, n, out_size), y3.shape
    assert y3.dtype == jnp.float32, y3.dtype
    assert bool(jnp.allclose(y3, ref3, atol=1e-3, rtol=1e-3)), "3D path mismatch"

    # 3-D path with a non-trivial activation.
    y3a = jax.block_until_ready(parallel_fc(x3, w, b, activation=jnp.tanh))
    assert bool(jnp.allclose(y3a, jnp.tanh(ref3), atol=1e-3, rtol=1e-3)), \
        "3D activation path mismatch"

    # 2-D input path (fused W_cat matmul): (B, L) -> (B, n, O)
    y2 = jax.block_until_ready(parallel_fc(x2, w, b))
    assert y2.shape == (B, n, out_size), y2.shape
    assert bool(jnp.allclose(y2, ref2, atol=1e-3, rtol=1e-3)), "2D fused mismatch"

    # 2-D input path, forced large-weight fallback (per-layer streaming).
    y2s = jax.block_until_ready(parallel_fc(x2, w, b, w_cat_max_bytes=0))
    assert bool(jnp.allclose(y2s, ref2, atol=1e-3, rtol=1e-3)), \
        "2D streamed mismatch"

    # No-bias path.
    ynb = jax.block_until_ready(parallel_fc(x3, w, None))
    assert bool(jnp.allclose(ynb, ref3 - b[None], atol=1e-3, rtol=1e-3)), \
        "no-bias path mismatch"

    print("KERNEL_OK")
</pallas_src>

<mosaic_0001>
module attributes {stable_mosaic.version = 11 : i64} {
  func.func @_fc_kernel(%arg0: i32, %arg1: i32, %arg2: memref<1x16x32xf32, #tpu.memory_space<vmem>>, %arg3: memref<1x32x32xf32, #tpu.memory_space<vmem>>, %arg4: memref<1x1x32xf32, #tpu.memory_space<vmem>>, %arg5: memref<1x16x32xf32, #tpu.memory_space<vmem>>) attributes {dimension_semantics = [#tpu.dimension_semantics<parallel>, #tpu.dimension_semantics<parallel>], iteration_bounds = array<i64: 4, 1>, scalar_prefetch = 0 : i64, scratch_operands = 0 : i64, tpu.core_type = #tpu.core_type<tc>, window_params = [{transform_indices = @transform_0, window_bounds = array<i64: 1, 16, 32>}, {transform_indices = @transform_1, window_bounds = array<i64: 1, 32, 32>}, {transform_indices = @transform_2, window_bounds = array<i64: 1, 1, 32>}, {transform_indices = @transform_3, window_bounds = array<i64: 1, 16, 32>}]} {
    %c0 = arith.constant 0 : index
    %c0_0 = arith.constant 0 : index
    %c0_1 = arith.constant 0 : index
    %0 = vector.load %arg2[%c0, %c0_0, %c0_1] : memref<1x16x32xf32, #tpu.memory_space<vmem>>, vector<1x16x32xf32>
    %1 = vector.shape_cast %0 : vector<1x16x32xf32> to vector<16x32xf32>
    %c0_2 = arith.constant 0 : index
    %c0_3 = arith.constant 0 : index
    %c0_4 = arith.constant 0 : index
    %2 = vector.load %arg3[%c0_2, %c0_3, %c0_4] : memref<1x32x32xf32, #tpu.memory_space<vmem>>, vector<1x32x32xf32>
    %3 = vector.shape_cast %2 : vector<1x32x32xf32> to vector<32x32xf32>
    %cst = arith.constant dense<0.000000e+00> : vector<16x32xf32>
    %4 = tpu.matmul %1, %3, %cst {dimension_numbers = #tpu.dot_dimension_numbers<[1], [0], [0], [1], [0, 0, 1, 1], [], []>} : vector<16x32xf32>, vector<32x32xf32>, vector<16x32xf32> -> vector<16x32xf32>
    %c0_5 = arith.constant 0 : index
    %c0_6 = arith.constant 0 : index
    %c0_7 = arith.constant 0 : index
    %5 = vector.load %arg4[%c0_5, %c0_6, %c0_7] : memref<1x1x32xf32, #tpu.memory_space<vmem>>, vector<1x1x32xf32>
    %6 = vector.shape_cast %5 : vector<1x1x32xf32> to vector<1x32xf32>
    %7 = vector.broadcast %6 : vector<1x32xf32> to vector<16x32xf32>
    %8 = arith.addf %4, %7 : vector<16x32xf32>
    %c0_8 = arith.constant 0 : index
    %c0_9 = arith.constant 0 : index
    %c0_10 = arith.constant 0 : index
    %9 = vector.load %arg5[%c0_8, %c0_9, %c0_10] : memref<1x16x32xf32, #tpu.memory_space<vmem>>, vector<1x16x32xf32>
    %10 = vector.shape_cast %9 : vector<1x16x32xf32> to vector<16x32xf32>
    %11 = vector.shape_cast %8 : vector<16x32xf32> to vector<1x16x32xf32>
    tpu.vector_store %arg5[%c0_8, %c0_9, %c0_10], %11 {strides = array<i32>} : memref<1x16x32xf32, #tpu.memory_space<vmem>>, vector<1x16x32xf32>,
    return
  }
  func.func @transform_0(%arg0: i32, %arg1: i32) -> (i32, i32, i32) {
    %c0_i32 = arith.constant 0 : i32
    %c0_i32_0 = arith.constant 0 : i32
    return %arg0, %arg1, %c0_i32 : i32, i32, i32
  }
  func.func @transform_1(%arg0: i32, %arg1: i32) -> (i32, i32, i32) {
    %c0_i32 = arith.constant 0 : i32
    %c0_i32_0 = arith.constant 0 : i32
    %c0_i32_1 = arith.constant 0 : i32
    return %arg0, %c0_i32, %c0_i32_0 : i32, i32, i32
  }
  func.func @transform_2(%arg0: i32, %arg1: i32) -> (i32, i32, i32) {
    %c0_i32 = arith.constant 0 : i32
    %c0_i32_0 = arith.constant 0 : i32
    %c0_i32_1 = arith.constant 0 : i32
    return %arg0, %c0_i32, %c0_i32_0 : i32, i32, i32
  }
  func.func @transform_3(%arg0: i32, %arg1: i32) -> (i32, i32, i32) {
    %c0_i32 = arith.constant 0 : i32
    %c0_i32_0 = arith.constant 0 : i32
    return %arg0, %arg1, %c0_i32 : i32, i32, i32
  }
}

</mosaic_0001>

<llo_original>
// kernel: parallel_fc.1
$region0: #{parallel_fc.1}
  #allocation0 [shape = 'u32[]', space=smem, size = 0x4, offset = 0x4, fixed_abs, tag = 'smem constant byte address 0x4 - core index']
  #allocation1 [shape = 'u32[144,128]{1,0:T(1,128)}', space=vmem, size = 0x12000, scoped, tag = 'internal scratch']
  %s0 = inlined_call_operand.vmem [shape: f32[4,16,32], index: 0, kind: input, shape index: {}]
  %s1 = inlined_call_operand.vmem [shape: f32[4,32,32], index: 1, kind: input, shape index: {}]
  %s2 = inlined_call_operand.vmem [shape: f32[4,1,32], index: 2, kind: input, shape index: {}]
  %s3 = inlined_call_operand.vmem [shape: f32[4,16,32], index: 3, kind: output, shape index: {}]
  %s4 = sld [smem:[#allocation0]]
  $region45: #{parallel_fc.1} parent=0
    _
  %s6 = ssub.s32 1, %s4
  %s7 = scalar_select 0, %s6, %s4
  loop: start=0, step=1, limit=6
  $region2: #{parallel_fc.1} parent=0 // loop_pre_header
    _
  $region3: #{parallel_fc.1} parent=0 // loop_header
    %s9 = sphi 0, %s13
    %p10 = scmp.ge.s32.totalorder %s9, 6
    %s16 = sphi 0, %s28
    %s17 = sphi 0, %s24
    %s18 = sphi 0, %s16
    %s19 = sphi 0, %s17
    %s20 = sphi 0, %s18
    %s21 = sphi 0, %s19
    %s33 = sphi 0, %s35
    %s36 = sphi 0, %s33
    %s37 = sphi 0, %s36
    %s53 = sphi 0, %s37
    %s59 = sphi 0, %s61
    %s62 = sphi 0, %s59
    %s63 = sphi 0, %s62
    %s79 = sphi 0, %s63
    %s85 = sphi 0, %s87
    %s88 = sphi 0, %s85
    %s89 = sphi 0, %s88
    %s105 = sphi 0, %s89
    %s113 = sphi 0, %s115
    %s116 = sphi 0, %s113
    %s117 = sphi 0, %s116
    %s133 = sphi 0, %s117
  $region4: #{parallel_fc.1} parent=0 // loop_header_branch
    %12 = sbr.rel (%p10) target = $region8
  $region5: #{parallel_fc.1} parent=0 // loop_body
    %s14 = ssub.s32 %s9, 1
    %s15 = ssub.s32 %s9, 2
    %s22 = sadd.s32 1, %s17
    %p23 = scmp.ge.s32.totalorder %s22, 1
    %s24 = scalar_select %p23, 0, %s22
    %s25 = sadd.s32 1, %s16
    %s26 = scalar_select %p23, %s25, %s16
    %p27 = scmp.ge.s32.totalorder %s26, 4
    %s28 = scalar_select %p27, 0, %s26
    %s29 = ssub.s32 %s16, %s28
    %s30 = ssub.s32 %s17, %s24
    %s31 = sor.u32 %s29, %s30
    %p32 = scmp.eq.s32.totalorder %s31, 0
    %s34 = sadd.s32 %s33, 1
    %s35 = scalar_select %p32, %s33, %s34
    %p38 = pneg %p32
    %p39 = scmp.eq.s32.totalorder %s9, 3
    %p40 = por %p38, %p39
    %p41 = scmp.ne.s32.totalorder %s33, %s36
    %p42 = scmp.eq.s32.totalorder %s9, 0
    %p43 = por %p41, %p42
    %p44 = scmp.ne.s32.totalorder %s33, %s36
    %p45 = scmp.eq.s32.totalorder %s14, 3
    %p46 = por %p44, %p45
    %p47 = scmp.ne.s32.totalorder %s36, %s37
    %p48 = scmp.eq.s32.totalorder %s14, 0
    %p49 = por %p47, %p48
    %p50 = scmp.ne.s32.totalorder %s36, %s37
    %p51 = scmp.eq.s32.totalorder %s15, 3
    %p52 = por %p50, %p51
    %p54 = scmp.ne.s32.totalorder %s37, %s53
    %p55 = scmp.eq.s32.totalorder %s15, 0
    %p56 = por %p54, %p55
    %s57 = ssub.s32 %s16, %s28
    %p58 = scmp.eq.s32.totalorder %s57, 0
    %s60 = sadd.s32 %s59, 1
    %s61 = scalar_select %p58, %s59, %s60
    %p64 = pneg %p58
    %p65 = scmp.eq.s32.totalorder %s9, 3
    %p66 = por %p64, %p65
    %p67 = scmp.ne.s32.totalorder %s59, %s62
    %p68 = scmp.eq.s32.totalorder %s9, 0
    %p69 = por %p67, %p68
    %p70 = scmp.ne.s32.totalorder %s59, %s62
    %p71 = scmp.eq.s32.totalorder %s14, 3
    %p72 = por %p70, %p71
    %p73 = scmp.ne.s32.totalorder %s62, %s63
    %p74 = scmp.eq.s32.totalorder %s14, 0
    %p75 = por %p73, %p74
    %p76 = scmp.ne.s32.totalorder %s62, %s63
    %p77 = scmp.eq.s32.totalorder %s15, 3
    %p78 = por %p76, %p77
    %p80 = scmp.ne.s32.totalorder %s63, %s79
    %p81 = scmp.eq.s32.totalorder %s15, 0
    %p82 = por %p80, %p81
    %s83 = ssub.s32 %s16, %s28
    %p84 = scmp.eq.s32.totalorder %s83, 0
    %s86 = sadd.s32 %s85, 1
    %s87 = scalar_select %p84, %s85, %s86
    %p90 = pneg %p84
    %p91 = scmp.eq.s32.totalorder %s9, 3
    %p92 = por %p90, %p91
    %p93 = scmp.ne.s32.totalorder %s85, %s88
    %p94 = scmp.eq.s32.totalorder %s9, 0
    %p95 = por %p93, %p94
    %p96 = scmp.ne.s32.totalorder %s85, %s88
    %p97 = scmp.eq.s32.totalorder %s14, 3
    %p98 = por %p96, %p97
    %p99 = scmp.ne.s32.totalorder %s88, %s89
    %p100 = scmp.eq.s32.totalorder %s14, 0
    %p101 = por %p99, %p100
    %p102 = scmp.ne.s32.totalorder %s88, %s89
    %p103 = scmp.eq.s32.totalorder %s15, 3
    %p104 = por %p102, %p103
    %p106 = scmp.ne.s32.totalorder %s89, %s105
    %p107 = scmp.eq.s32.totalorder %s15, 0
    %p108 = por %p106, %p107
    %s109 = ssub.s32 %s16, %s28
    %s110 = ssub.s32 %s17, %s24
    %s111 = sor.u32 %s109, %s110
    %p112 = scmp.eq.s32.totalorder %s111, 0
    %s114 = sadd.s32 %s113, 1
    %s115 = scalar_select %p112, %s113, %s114
    %p118 = pneg %p112
    %p119 = scmp.eq.s32.totalorder %s9, 3
    %p120 = por %p118, %p119
    %p121 = scmp.ne.s32.totalorder %s113, %s116
    %p122 = scmp.eq.s32.totalorder %s9, 0
    %p123 = por %p121, %p122
    %p124 = scmp.ne.s32.totalorder %s113, %s116
    %p125 = scmp.eq.s32.totalorder %s14, 3
    %p126 = por %p124, %p125
    %p127 = scmp.ne.s32.totalorder %s116, %s117
    %p128 = scmp.eq.s32.totalorder %s14, 0
    %p129 = por %p127, %p128
    %p130 = scmp.ne.s32.totalorder %s116, %s117
    %p131 = scmp.eq.s32.totalorder %s15, 3
    %p132 = por %p130, %p131
    %p134 = scmp.ne.s32.totalorder %s117, %s133
    %p135 = scmp.eq.s32.totalorder %s15, 0
    %p136 = por %p134, %p135
    %p137 = scmp.le.s32.totalorder 1, %s9
    %p138 = scmp.lt.s32.totalorder %s9, 5
    %p139 = pnand %p137, %p138
    %p140 = pneg %p139
    // Predicated region
    $region9: #{parallel_fc.1} parent=5 // pred_check
      _
    $region10: #{parallel_fc.1} parent=5 // pred_check_branch
      %142 = sbr.rel (%p139) target = $region12
    $region11: #{parallel_fc.1} parent=5 // pred_region
      %s143 = ssub.s32 %s9, 1
    $region12: #{parallel_fc.1} parent=5 // pred_fallthru
      _
    %p144 = scmp.lt.s32.totalorder %s9, 4
    // Predicated region
    $region13: #{parallel_fc.1} parent=5 // pred_check
      %p145 = pneg %p144
    $region14: #{parallel_fc.1} parent=5 // pred_check_branch
      %147 = sbr.rel (%p145) target = $region16
    $region15: #{parallel_fc.1} parent=5 // pred_region
      // Predicated region
      $region17: #{parallel_fc.1} parent=15 // pred_check
        %p148 = pneg %p43
      $region18: #{parallel_fc.1} parent=15 // pred_check_branch
        %150 = sbr.rel (%p148) target = $region20
      $region19: #{parallel_fc.1} parent=15 // pred_region
        %s151 = smul.u32 2, %s17
        %p152 = scmp.lt.s32.totalorder %s16, 3
        %s153 = scalar_select %p152, %s16, 3
        %p154 = scmp.lt.s32.totalorder %s151, 1
        %s155 = scalar_select %p154, %s151, 1
        %s156 = smul.addr %s153, 2
        %s157 = sadd.s32 %s155, %s156
        %s158 = smul.addr %s157, 8
        %s159 = scalar_lea.vmem %s0, %s158
        %s160 = smul.u32 2, %s17
      $region20: #{parallel_fc.1} parent=15 // pred_fallthru
        _
      // Predicated region
      $region21: #{parallel_fc.1} parent=15 // pred_check
        %p161 = pneg %p69
      $region22: #{parallel_fc.1} parent=15 // pred_check_branch
        %163 = sbr.rel (%p161) target = $region24
      $region23: #{parallel_fc.1} parent=15 // pred_region
        %p164 = scmp.lt.s32.totalorder %s16, 3
        %s165 = scalar_select %p164, %s16, 3
        %s166 = smul.addr %s165, 4
        %s167 = smul.addr %s166, 8
        %s168 = scalar_lea.vmem %s1, %s167
      $region24: #{parallel_fc.1} parent=15 // pred_fallthru
        _
      // Predicated region
      $region25: #{parallel_fc.1} parent=15 // pred_check
        %p169 = pneg %p95
      $region26: #{parallel_fc.1} parent=15 // pred_check_branch
        %171 = sbr.rel (%p169) target = $region28
      $region27: #{parallel_fc.1} parent=15 // pred_region
        %p172 = scmp.lt.s32.totalorder %s16, 3
        %s173 = scalar_select %p172, %s16, 3
        %s174 = scalar_lea.vmem %s2, %s173
      $region28: #{parallel_fc.1} parent=15 // pred_fallthru
        _
    $region16: #{parallel_fc.1} parent=5 // pred_fallthru
      _
    %p175 = scmp.le.s32.totalorder 1, %s9
    %p176 = scmp.lt.s32.totalorder %s9, 5
    %p177 = pnand %p175, %p176
    %p178 = pneg %p177
    // Predicated region
    $region29: #{parallel_fc.1} parent=5 // pred_check
      _
    $region30: #{parallel_fc.1} parent=5 // pred_check_branch
      %180 = sbr.rel (%p177) target = $region32
    $region31: #{parallel_fc.1} parent=5 // pred_region
      %s181 = ssub.s32 %s9, 1
      %s182 = smul.u32 2, %s19
      %p183 = scmp.lt.s32.totalorder %s18, 3
      %s184 = scalar_select %p183, %s18, 3
      %p185 = scmp.lt.s32.totalorder %s182, 1
      %s186 = scalar_select %p185, %s182, 1
      %s187 = smul.addr %s184, 2
      %s188 = sadd.s32 %s186, %s187
      %s189 = smul.addr %s188, 8
      %s190 = scalar_lea.vmem %s0, %s189
      %p191 = pneg %p49
      %p192 = pneg %p46
      %p193 = scmp.lt.s32.totalorder %s18, 3
      %s194 = scalar_select %p193, %s18, 3
      %s195 = smul.addr %s194, 4
      %s196 = smul.addr %s195, 8
      %s197 = scalar_lea.vmem %s1, %s196
      %p198 = pneg %p75
      %p199 = pneg %p72
      %p200 = scmp.lt.s32.totalorder %s18, 3
      %s201 = scalar_select %p200, %s18, 3
      %s202 = scalar_lea.vmem %s2, %s201
      %p203 = pneg %p101
      %p204 = pneg %p98
      %p205 = pneg %p129
      %p206 = pneg %p126
      %s207 = smul.u32 2, %s19
      %p208 = scmp.lt.s32.totalorder %s18, 3
      %s209 = scalar_select %p208, %s18, 3
      %p210 = scmp.lt.s32.totalorder %s207, 1
      %s211 = scalar_select %p210, %s207, 1
      %s212 = smul.addr %s209, 2
      %s213 = sadd.s32 %s211, %s212
      %s214 = smul.addr %s213, 8
      %s215 = scalar_lea.vmem %s3, %s214
      %s216 = smul.u32 2, %s19
      %p217 = scmp.lt.s32.totalorder %s18, 3
      %s218 = scalar_select %p217, %s18, 3
      %p219 = scmp.lt.s32.totalorder %s216, 1
      %s220 = scalar_select %p219, %s216, 1
      %s221 = smul.addr %s218, 2
      %s222 = sadd.s32 %s220, %s221
      %s223 = smul.addr %s222, 8
      %s224 = scalar_lea.vmem %s0, %s223
      %s225 = smul.u32 2, %s19
      %p226 = scmp.lt.s32.totalorder %s18, 3
      %s227 = scalar_select %p226, %s18, 3
      %s228 = smul.addr %s227, 4
      %s229 = smul.addr %s228, 8
      %s230 = scalar_lea.vmem %s1, %s229
      %p231 = scmp.lt.s32.totalorder %s18, 3
      %s232 = scalar_select %p231, %s18, 3
      %s233 = scalar_lea.vmem %s2, %s232
      %s234 = smul.u32 2, %s19
      %p235 = scmp.lt.s32.totalorder %s18, 3
      %s236 = scalar_select %p235, %s18, 3
      %p237 = scmp.lt.s32.totalorder %s234, 1
      %s238 = scalar_select %p237, %s234, 1
      %s239 = smul.addr %s236, 2
      %s240 = sadd.s32 %s238, %s239
      %s241 = smul.addr %s240, 8
      %s242 = scalar_lea.vmem %s3, %s241
      %s243 = smul.u32 2, %s19
      %v244 = vld [vmem:[%s224] sm:$0xff]
      %v245 = vld [vmem:[%s224 + $0x8] sm:$0xff]
      %v246 = vld [vmem:[%s230] sm:$0xff]
      %v247 = vld [vmem:[%s230 + $0x8] sm:$0xff]
      %v248 = vld [vmem:[%s230 + $0x10] sm:$0xff]
      %v249 = vld [vmem:[%s230 + $0x18] sm:$0xff]
      %v250 = vld [vmem:[%s233] sm:$0x1]
      %v252 = vlaneseq
      %v253 = vshrl.u32 %v252, 7
      %v254 = vsub.s32 0, %v253
      %v255 = vrot.slane %v250, %v254
      %vm257 = vcmask 261120
      %v259 = vsel %vm257, %v244, 0
      %v262 = vsel %vm257, %v245, 0
      %264 = vmatprep.subr.mxu0 0.0
      %265 = vmatpush1.msra.mxu0 0.0
      %266 = vmatprep.subr.mxu0 0.0
      %267 = vmatpush1.msra.mxu0 0.0
      %268 = vmatprep.subr.mxu0 0.0
      %269 = vmatpush1.msra.mxu0 0.0
      %270 = vmatprep.subr.mxu0 0.0
      %271 = vmatpush1.msra.mxu0 0.0
      %272 = vmatprep.subr.mxu0 0.0
      %273 = vmatpush1.msra.mxu0 0.0
      %274 = vmatprep.subr.mxu0 0.0
      %275 = vmatpush1.msra.mxu0 0.0
      %276 = vmatprep.subr.mxu0 0.0
      %277 = vmatpush1.msra.mxu0 0.0
      %278 = vmatprep.subr.mxu0 0.0
      %279 = vmatpush1.msra.mxu0 0.0
      %280 = vmatprep.subr.mxu0 0.0
      %281 = vmatpush1.msra.mxu0 0.0
      %282 = vmatprep.subr.mxu0 0.0
      %283 = vmatpush1.msra.mxu0 0.0
      %284 = vmatprep.subr.mxu0 0.0
      %285 = vmatpush1.msra.mxu0 0.0
      %286 = vmatprep.subr.mxu0 0.0
      %287 = vmatpush1.msra.mxu0 0.0
      %288 = vmatprep.subr.mxu0 0.0
      %289 = vmatpush1.msra.mxu0 %v249
      %290 = vmatprep.subr.mxu0 0.0
      %291 = vmatpush1.msra.mxu0 %v248
      %292 = vmatprep.subr.mxu0 0.0
      %293 = vmatpush1.msra.mxu0 %v247
      %294 = vmatprep.subr.mxu0 0.0
      %295 = vmatpush1.msra.mxu0 %v246
      %296 = vmatprep.subr.mxu0 0.0
      %297 = vmatpush2.msra.mxu0 0.0
      %298 = vmatprep.subr.mxu0 0.0
      %299 = vmatpush2.msra.mxu0 0.0
      %300 = vmatprep.subr.mxu0 0.0
      %301 = vmatpush2.msra.mxu0 0.0
      %302 = vmatprep.subr.mxu0 0.0
      %303 = vmatpush2.msra.mxu0 0.0
      %304 = vmatprep.subr.mxu0 0.0
      %305 = vmatpush2.msra.mxu0 0.0
      %306 = vmatprep.subr.mxu0 0.0
      %307 = vmatpush2.msra.mxu0 0.0
      %308 = vmatprep.subr.mxu0 0.0
      %309 = vmatpush2.msra.mxu0 0.0
      %310 = vmatprep.subr.mxu0 0.0
      %311 = vmatpush2.msra.mxu0 0.0
      %312 = vmatprep.subr.mxu0 0.0
      %313 = vmatpush2.msra.mxu0 0.0
      %314 = vmatprep.subr.mxu0 0.0
      %315 = vmatpush2.msra.mxu0 0.0
      %316 = vmatprep.subr.mxu0 0.0
      %317 = vmatpush2.msra.mxu0 0.0
      %318 = vmatprep.subr.mxu0 0.0
      %319 = vmatpush2.msra.mxu0 0.0
      %320 = vmatprep.subr.mxu0 0.0
      %321 = vmatpush2.msra.mxu0 0.0
      %322 = vmatprep.subr.mxu0 0.0
      %323 = vmatpush2.msra.mxu0 0.0
      %324 = vmatprep.subr.mxu0 0.0
      %325 = vmatpush2.msra.mxu0 0.0
      %326 = vmatprep.subr.mxu0 0.0
      %327 = vmatpush2.msra.mxu0 0.0
      %328 = vmatprep.mubr.f32.mxu0 0.0
      %329 = vmatmul.mubr.f32.gmra.mxu0 %v259
      %v330 = vpop.f32.mrf.mxu0
      %v331 = vadd.f32 %v255, %v330
      %v332 = vpop.f32.mrf.mxu0
      %333 = vmatprep.mubr.f32.mxu0 0.0
      %334 = vmatmul.mubr.f32.gmra.mxu0 %v262
      %v335 = vpop.f32.mrf.mxu0
      %v336 = vadd.f32 %v255, %v335
      %v337 = vpop.f32.mrf.mxu0
      %338 = vdwg.mxu0
      %339 = vst.msk [vmem:[%s242] sm:$0xff] %vm257, %v331
      %340 = vst.msk [vmem:[%s242 + $0x8] sm:$0xff] %vm257, %v336
      %s341 = smul.u32 2, %s19
      %p342 = scmp.lt.s32.totalorder %s18, 3
      %s343 = scalar_select %p342, %s18, 3
      %p344 = scmp.lt.s32.totalorder %s341, 1
      %s345 = scalar_select %p344, %s341, 1
      %s346 = smul.addr %s343, 2
      %s347 = sadd.s32 %s345, %s346
      %s348 = smul.addr %s347, 8
      %s349 = scalar_lea.vmem %s3, %s348
      // Predicated region
      $region33: #{parallel_fc.1} parent=31 // pred_check
        %p350 = pneg %p126
      $region34: #{parallel_fc.1} parent=31 // pred_check_branch
        %352 = sbr.rel (%p350) target = $region36
      $region35: #{parallel_fc.1} parent=31 // pred_region
        %s353 = smul.u32 2, %s19
      $region36: #{parallel_fc.1} parent=31 // pred_fallthru
        _
    $region32: #{parallel_fc.1} parent=5 // pred_fallthru
      _
    %p354 = scmp.le.s32.totalorder 2, %s9
    // Predicated region
    $region37: #{parallel_fc.1} parent=5 // pred_check
      %p355 = pneg %p354
    $region38: #{parallel_fc.1} parent=5 // pred_check_branch
      %357 = sbr.rel (%p355) target = $region40
    $region39: #{parallel_fc.1} parent=5 // pred_region
      %s358 = ssub.s32 %s9, 2
      // Predicated region
      $region41: #{parallel_fc.1} parent=39 // pred_check
        %p359 = pneg %p132
      $region42: #{parallel_fc.1} parent=39 // pred_check_branch
        %361 = sbr.rel (%p359) target = $region44
      $region43: #{parallel_fc.1} parent=39 // pred_region
        %s362 = smul.u32 2, %s21
        %p363 = scmp.lt.s32.totalorder %s20, 3
        %s364 = scalar_select %p363, %s20, 3
        %p365 = scmp.lt.s32.totalorder %s362, 1
        %s366 = scalar_select %p365, %s362, 1
        %s367 = smul.addr %s364, 2
        %s368 = sadd.s32 %s366, %s367
        %s369 = smul.addr %s368, 8
        %s370 = scalar_lea.vmem %s3, %s369
      $region44: #{parallel_fc.1} parent=39 // pred_fallthru
        _
    $region40: #{parallel_fc.1} parent=5 // pred_fallthru
      _
  $region6: #{parallel_fc.1} parent=0 // loop_footer
    %s13 = sadd.s32 1, %s9
  $region7: #{parallel_fc.1} parent=0 // loop_footer_branch
    %8 = sbr.rel target = $region3
  $region8: #{parallel_fc.1} parent=0 // loop_exit
    _

</llo_original>
